<compile_context>
chip_gen: v6e
topology: v6e:2x2x1
jax: 0.10.0
libtpu: 0.0.40
codegen_flags: <defaults>
</compile_context>

<pallas_src>
from functools import partial
import math

import numpy as np
import jax
import jax.numpy as jnp
from jax.experimental import pallas as pl
from jax.experimental.pallas import tpu as pltpu


# --------------------------------------------------------------------------- #
# Kernels
# --------------------------------------------------------------------------- #
def _finalize(out, clamp_range, apply_log, o_ref):
    if clamp_range is not None:
        out = jnp.clip(out, clamp_range[0], clamp_range[1])
    if apply_log:
        out = jnp.log(out)
    o_ref[...] = out.astype(o_ref.dtype)


def _hi_lo(v):
    """Split an f32 array into a bf16 (hi, lo) pair; hi + lo ≈ v to ~2^-18 rel."""
    hi = v.astype(jnp.bfloat16)
    lo = (v - hi.astype(jnp.float32)).astype(jnp.bfloat16)
    return hi, lo


def _stat_kernel_packed(w_ref, x_ref, o_ref, *, stat, R, k,
                        correction, clamp_range, apply_log):
    """(TILE, k*R) block -> (TILE, k); each lane row = k packed segments of len R.

    w_ref is the hoisted, VMEM-resident 0/1 bf16 segment weight:
      mean     : (2*LW, k)    -> one matmul gives Σ_seg y       per segment
      var/std  : (4*LW, 2k)   -> one matmul gives [Σ_seg y | Σ_seg y²]
    where y = x - c and c is the per-row mean (shift for numerical stability).
    """
    x = x_ref[...].astype(jnp.float32)                     # (T, LW)

    # Per-row shift (XLU lane reduce — the MXU/VPU are the busy units here).
    c = jnp.mean(x, axis=-1, keepdims=True)                # (T, 1)
    y = x - c
    y_hi, y_lo = _hi_lo(y)

    if stat == "mean":
        z = jnp.concatenate([y_hi, y_lo], axis=-1)         # (T, 2*LW) bf16
        s = jnp.dot(z, w_ref[...], preferred_element_type=jnp.float32)  # (T, k)
        out = c + s * (1.0 / R)
    else:
        q = y * y
        q_hi, q_lo = _hi_lo(q)
        z = jnp.concatenate([y_hi, y_lo, q_hi, q_lo], axis=-1)          # (T, 4*LW)
        s = jnp.dot(z, w_ref[...], preferred_element_type=jnp.float32)  # (T, 2k)
        sy = s[:, :k]                                      # Σ_seg y
        sq = s[:, k:]                                      # Σ_seg y²
        # Σ(y - ȳ)² = Σy² - (Σy)²/R  (shift-invariant, so equals Σ(x - x̄)²).
        # NOTE: torch.var returns inf/nan when R <= correction; we clamp the
        # denominator to 1 instead (documented divergence).
        denom = max(R - correction, 1)
        var = (sq - sy * sy * (1.0 / R)) * (1.0 / denom)
        var = jnp.maximum(var, 0.0)                        # guard rounding negatives
        out = var if stat == "var" else jnp.sqrt(var)

    # Rows of the final partial grid block compute on garbage; their writes are
    # masked by Pallas, so no masking of `out` is needed for correctness.
    _finalize(out, clamp_range, apply_log, o_ref)


def _stat_kernel_rowreduce(x_ref, o_ref, *, stat, correction,
                           clamp_range, apply_log):
    """(TILE, R) block -> (TILE, 1): plain exact-f32 lane reduction (fallback)."""
    x = x_ref[...].astype(jnp.float32)
    n = x.shape[-1]
    mean = jnp.sum(x, axis=-1, keepdims=True) * (1.0 / n)
    if stat == "mean":
        out = mean
    else:
        d = x - mean
        denom = max(n - correction, 1)  # torch gives inf/nan for n <= correction
        var = jnp.sum(d * d, axis=-1, keepdims=True) * (1.0 / denom)
        out = var if stat == "var" else jnp.sqrt(var)
    _finalize(out, clamp_range, apply_log, o_ref)


# --------------------------------------------------------------------------- #
# Host-side helpers
# --------------------------------------------------------------------------- #
def _segment_weights(R, k, stat):
    """0/1 bf16 segment weight, built once on the host and kept VMEM-resident.

    Rows 0:LW and LW:2LW both carry the segment selector (they multiply the
    bf16 hi and lo halves of the same f32 operand).  For var/std a second
    block-diagonal copy reduces y² into the next k output columns.
    """
    LW = k * R
    lane = np.arange(LW, dtype=np.int64)
    seg = np.arange(k, dtype=np.int64)
    sel = (lane[:, None] // R == seg[None, :]).astype(np.float32)   # (LW, k)
    sel2 = np.concatenate([sel, sel], axis=0)                        # (2LW, k)
    if stat == "mean":
        w = sel2
    else:
        z = np.zeros_like(sel2)
        w = np.block([[sel2, z], [z, sel2]])                         # (4LW, 2k)
    return jnp.asarray(w, dtype=jnp.bfloat16)


_TARGET_F32_BLOCK_BYTES = 1 << 20   # ~1 MiB f32-equivalent input per block:
                                    # >=85% of HBM roofline, and the in-kernel
                                    # f32 temporaries + double buffering stay
                                    # ~10 MiB — safe on v7x's 64 MiB VMEM.


def _choose_row_tile(prows, lanes, itemsize):
    granule = max(8, 32 // itemsize)      # (8,128) f32 / (16,128) bf16 / (32,128) i8
    if prows <= granule:
        return prows                      # single block == full array (allowed)
    target_rows = max(granule, (_TARGET_F32_BLOCK_BYTES // 4) // max(lanes, 1))
    t = max(granule, (target_rows // granule) * granule)
    # Split the slab into >= 8 grid steps whenever it is big enough: both
    # TensorCores get >= 4 blocks on v7x and the input DMA overlaps compute on
    # v5e / v6e (per-step overhead is only ~0.35 us).
    min_steps = 8
    if prows > min_steps * granule:
        cap = -(-prows // min_steps)
        cap = ((cap + granule - 1) // granule) * granule
        t = min(t, cap)
    return min(t, prows)


# --------------------------------------------------------------------------- #
# Wrapper
# --------------------------------------------------------------------------- #
def stat_layer(x, *, stat="var", dim, keepdim=True,
               clamp_range=None, apply_log=False, correction=1):
    """JAX/Pallas equivalent of braindecode StatLayer.forward.

    stat: "mean", "var" or "std" (torch.var/std default to correction=1).
    Feed activations in their native dtype (e.g. bf16); the kernel casts to f32
    in-register, so pre-casting in the wrapper only wastes HBM bandwidth.
    """
    assert stat in ("mean", "var", "std")
    ndim = x.ndim
    dim = dim % ndim

    # Move the reduction axis last, flatten the rest to rows.  Fast path:
    # dim == last (LogVarLayer) -> transpose is a no-op and the reshapes are
    # free (contiguous).  Other dims cost one transposed HBM copy (slow path).
    perm = tuple(i for i in range(ndim) if i != dim) + (dim,)
    xt = x if dim == ndim - 1 else jnp.transpose(x, perm)
    lead_shape = xt.shape[:-1]
    R = xt.shape[-1]
    rows = math.prod(lead_shape) if lead_shape else 1
    x2 = xt.reshape(rows, R)

    # Lane packing: k whole segments of length R per lane-dense row (a free
    # contiguous reshape).  Only taken when it pays off on the MXU (k >= 8, so
    # R <= 64); R >= 128 is already lane-dense and falls through to the plain
    # lane-reduce kernel.
    k = 1
    if R >= 2:
        for lw in (512, 384, 256, 128):
            if lw % R == 0:
                kk = lw // R
                if kk >= 8 and rows % kk == 0:
                    k = kk
                    break

    compiler_params = pltpu.CompilerParams(
        dimension_semantics=("parallel",),
        vmem_limit_bytes=32 * 1024 * 1024,
    )

    if k > 1:
        x2 = x2.reshape(rows // k, k * R)
        w = _segment_weights(R, k, stat)
        prows, lanes = x2.shape
        tile = _choose_row_tile(prows, lanes, x2.dtype.itemsize)
        nsteps = pl.cdiv(prows, tile)
        kernel = partial(_stat_kernel_packed, stat=stat, R=R, k=k,
                         correction=correction, clamp_range=clamp_range,
                         apply_log=apply_log)
        out2 = pl.pallas_call(
            kernel,
            out_shape=jax.ShapeDtypeStruct((prows, k), x.dtype),
            grid_spec=pltpu.PrefetchScalarGridSpec(
                num_scalar_prefetch=0,
                grid=(nsteps,),
                in_specs=[
                    # Constant index_map -> DMA'd once, stays resident in VMEM.
                    pl.BlockSpec(w.shape, lambda i: (0, 0)),
                    pl.BlockSpec((tile, lanes), lambda i: (i, 0)),
                ],
                out_specs=pl.BlockSpec((tile, k), lambda i: (i, 0)),
            ),
            compiler_params=compiler_params,
        )(w, x2)
    else:
        prows, lanes = x2.shape
        tile = _choose_row_tile(prows, lanes, x2.dtype.itemsize)
        nsteps = pl.cdiv(prows, tile)
        kernel = partial(_stat_kernel_rowreduce, stat=stat,
                         correction=correction, clamp_range=clamp_range,
                         apply_log=apply_log)
        out2 = pl.pallas_call(
            kernel,
            out_shape=jax.ShapeDtypeStruct((prows, 1), x.dtype),
            grid_spec=pltpu.PrefetchScalarGridSpec(
                num_scalar_prefetch=0,
                grid=(nsteps,),
                in_specs=[pl.BlockSpec((tile, lanes), lambda i: (i, 0))],
                out_specs=pl.BlockSpec((tile, 1), lambda i: (i, 0)),
            ),
            compiler_params=compiler_params,
        )(x2)

    out = out2.reshape(lead_shape)        # reduced axis dropped, row order preserved
    if keepdim:
        out = jnp.expand_dims(out, axis=ndim - 1)   # reduced axis (permuted order)
        inv = [0] * ndim
        for i, p in enumerate(perm):
            inv[p] = i
        out = jnp.transpose(out, inv)     # restore original axis order (no-op if dim last)
    return out


# --------------------------------------------------------------------------- #
# Reference + test
# --------------------------------------------------------------------------- #
def _reference(x, *, stat, dim, keepdim=True, clamp_range=None,
               apply_log=False, correction=1):
    if stat == "mean":
        out = jnp.mean(x, axis=dim, keepdims=keepdim)
    elif stat == "var":
        out = jnp.var(x, axis=dim, keepdims=keepdim, ddof=correction)
    else:
        out = jnp.std(x, axis=dim, keepdims=keepdim, ddof=correction)
    if clamp_range is not None:
        out = jnp.clip(out, clamp_range[0], clamp_range[1])
    if apply_log:
        out = jnp.log(out)
    return out


if __name__ == "__main__":
    # StatLayer has no learnable parameters -> nothing to initialize.
    key = jax.random.PRNGKey(0)
    B, C, H, W = 2, 4, 16, 16                  # NCHW, as PyTorch conv outputs
    x = jax.random.normal(key, (B, C, H, W), dtype=jnp.float32)

    # LogVarLayer configuration: var along dim=3, clamp, log (packed path).
    logvar_cfg = dict(stat="var", dim=3, keepdim=True,
                      clamp_range=(1e-6, 1e6), apply_log=True)
    out = jax.block_until_ready(jax.jit(partial(stat_layer, **logvar_cfg))(x))
    ref = _reference(x, **logvar_cfg)
    assert out.shape == (B, C, H, 1), out.shape
    # bf16 (hi, lo) MXU segment sums -> ~1e-5 relative accuracy
    assert jnp.allclose(out, ref, atol=1e-4, rtol=1e-4), "logvar mismatch vs reference"

    # Plain mean StatLayer (packed path, no clamp / log).
    out_mean = jax.block_until_ready(
        jax.jit(partial(stat_layer, stat="mean", dim=3, keepdim=True))(x))
    ref_mean = _reference(x, stat="mean", dim=3, keepdim=True)
    assert out_mean.shape == (B, C, H, 1)
    assert jnp.allclose(out_mean, ref_mean, atol=1e-4, rtol=1e-4), "mean mismatch"

    # std with a reduction length that does not pack (fallback lane-reduce path),
    # keepdim=False.
    y = jax.random.normal(jax.random.PRNGKey(1), (2, 4, 16, 20), dtype=jnp.float32)
    out_std = jax.block_until_ready(
        jax.jit(partial(stat_layer, stat="std", dim=3, keepdim=False))(y))
    ref_std = _reference(y, stat="std", dim=3, keepdim=False)
    assert out_std.shape == (2, 4, 16), out_std.shape
    assert jnp.allclose(out_std, ref_std, atol=1e-5, rtol=1e-5), "std mismatch"

    print("KERNEL_OK")
</pallas_src>

<mosaic_0001>
module attributes {stable_mosaic.version = 11 : i64} {
  func.func @_stat_kernel_packed(%arg0: i32, %arg1: memref<2048x64xbf16, #tpu.memory_space<vmem>>, %arg2: memref<4x512xf32, #tpu.memory_space<vmem>>, %arg3: memref<4x32xf32, #tpu.memory_space<vmem>>) attributes {dimension_semantics = [#tpu.dimension_semantics<parallel>], iteration_bounds = array<i64: 1>, scalar_prefetch = 0 : i64, scratch_operands = 0 : i64, tpu.core_type = #tpu.core_type<tc>, window_params = [{pipeline_mode = #tpu.pipeline_mode<synchronous>, transform_indices = @transform_0, window_bounds = array<i64: 2048, 64>}, {transform_indices = @transform_1, window_bounds = array<i64: 4, 512>}, {transform_indices = @transform_2, window_bounds = array<i64: 4, 32>}]} {
    %c0 = arith.constant 0 : index
    %c0_0 = arith.constant 0 : index
    %0 = vector.load %arg2[%c0, %c0_0] : memref<4x512xf32, #tpu.memory_space<vmem>>, vector<4x512xf32>
    %cst = arith.constant dense<0.000000e+00> : vector<4xf32>
    %1 = vector.multi_reduction <add>, %0, %cst [1] : vector<4x512xf32> to vector<4xf32>
    %2 = vector.shape_cast %1 : vector<4xf32> to vector<4x1xf32>
    %cst_1 = arith.constant 5.120000e+02 : f32
    %3 = vector.broadcast %cst_1 : f32 to vector<4x1xf32>
    %4 = arith.divf %2, %3 : vector<4x1xf32>
    %5 = vector.broadcast %4 : vector<4x1xf32> to vector<4x512xf32>
    %6 = arith.subf %0, %5 : vector<4x512xf32>
    %7 = arith.truncf %6 : vector<4x512xf32> to vector<4x512xbf16>
    %8 = arith.extf %7 : vector<4x512xbf16> to vector<4x512xf32>
    %9 = arith.subf %6, %8 : vector<4x512xf32>
    %10 = arith.truncf %9 : vector<4x512xf32> to vector<4x512xbf16>
    %11 = arith.mulf %6, %6 : vector<4x512xf32>
    %12 = arith.truncf %11 : vector<4x512xf32> to vector<4x512xbf16>
    %13 = arith.extf %12 : vector<4x512xbf16> to vector<4x512xf32>
    %14 = arith.subf %11, %13 : vector<4x512xf32>
    %15 = arith.truncf %14 : vector<4x512xf32> to vector<4x512xbf16>
    %16 = tpu.concatenate %7, %10, %12, %15 in 1 : vector<4x512xbf16>, vector<4x512xbf16>, vector<4x512xbf16>, vector<4x512xbf16> -> vector<4x2048xbf16>
    %c0_2 = arith.constant 0 : index
    %c0_3 = arith.constant 0 : index
    %17 = vector.load %arg1[%c0_2, %c0_3] : memref<2048x64xbf16, #tpu.memory_space<vmem>>, vector<2048x64xbf16>
    %cst_4 = arith.constant dense<0.000000e+00> : vector<4x64xf32>
    %18 = tpu.matmul %16, %17, %cst_4 {dimension_numbers = #tpu.dot_dimension_numbers<[1], [0], [0], [1], [0, 0, 1, 1], [], []>} : vector<4x2048xbf16>, vector<2048x64xbf16>, vector<4x64xf32> -> vector<4x64xf32>
    %19 = vector.extract_strided_slice %18 {offsets = [0, 0], sizes = [4, 32], strides = [1, 1]} : vector<4x64xf32> to vector<4x32xf32>
    %20 = vector.extract_strided_slice %18 {offsets = [0, 32], sizes = [4, 32], strides = [1, 1]} : vector<4x64xf32> to vector<4x32xf32>
    %21 = arith.mulf %19, %19 : vector<4x32xf32>
    %cst_5 = arith.constant 6.250000e-02 : f32
    %22 = vector.broadcast %cst_5 : f32 to vector<4x32xf32>
    %23 = arith.mulf %21, %22 : vector<4x32xf32>
    %24 = arith.subf %20, %23 : vector<4x32xf32>
    %cst_6 = arith.constant 0.0666666701 : f32
    %25 = vector.broadcast %cst_6 : f32 to vector<4x32xf32>
    %26 = arith.mulf %24, %25 : vector<4x32xf32>
    %cst_7 = arith.constant 0.000000e+00 : f32
    %27 = vector.broadcast %cst_7 : f32 to vector<4x32xf32>
    %28 = arith.maximumf %26, %27 : vector<4x32xf32>
    %cst_8 = arith.constant 9.99999997E-7 : f32
    %cst_9 = arith.constant 1.000000e+06 : f32
    %29 = vector.broadcast %cst_8 : f32 to vector<4x32xf32>
    %30 = arith.maximumf %29, %28 : vector<4x32xf32>
    %31 = vector.broadcast %cst_9 : f32 to vector<4x32xf32>
    %32 = arith.minimumf %31, %30 : vector<4x32xf32>
    %33 = math.log %32 : vector<4x32xf32>
    %c0_10 = arith.constant 0 : index
    %c0_11 = arith.constant 0 : index
    %34 = vector.load %arg3[%c0_10, %c0_11] : memref<4x32xf32, #tpu.memory_space<vmem>>, vector<4x32xf32>
    tpu.vector_store %arg3[%c0_10, %c0_11], %33 {strides = array<i32>} : memref<4x32xf32, #tpu.memory_space<vmem>>, vector<4x32xf32>,
    return
  }
  func.func @transform_0(%arg0: i32) -> (i32, i32) {
    %c0_i32 = arith.constant 0 : i32
    %c0_i32_0 = arith.constant 0 : i32
    %c0_i32_1 = arith.constant 0 : i32
    return %c0_i32, %c0_i32_0 : i32, i32
  }
  func.func @transform_1(%arg0: i32) -> (i32, i32) {
    %c0_i32 = arith.constant 0 : i32
    %c0_i32_0 = arith.constant 0 : i32
    return %arg0, %c0_i32 : i32, i32
  }
  func.func @transform_2(%arg0: i32) -> (i32, i32) {
    %c0_i32 = arith.constant 0 : i32
    %c0_i32_0 = arith.constant 0 : i32
    return %arg0, %c0_i32 : i32, i32
  }
}

</mosaic_0001>

<llo_original>
// kernel: stat_layer.1
$region0: #{stat_layer.1}
  #allocation0 [shape = 'u32[]', space=smem, size = 0x4, offset = 0x4, fixed_abs, tag = 'smem constant byte address 0x4 - core index']
  #allocation1 [shape = 'u32[144,128]{1,0:T(1,128)}', space=vmem, size = 0x12000, scoped, tag = 'internal scratch']
  %s0 = inlined_call_operand.hbm [shape: bf16[2048,64], index: 0, kind: input, shape index: {}]
  %s1 = inlined_call_operand.vmem [shape: f32[4,512], index: 1, kind: input, shape index: {}]
  %s2 = inlined_call_operand.vmem [shape: f32[4,32], index: 2, kind: output, shape index: {}]
  %s3 = sld [smem:[#allocation0]]
  $region22: #{stat_layer.1} parent=0
    _
  %s5 = ssub.s32 1, %s3
  %s6 = scalar_select 0, %s5, %s3
  $region1: #{stat_layer.1} parent=0
    #allocation2 [shape = 'u8[524288]{0}', space=vmem, size = 0x80000, scoped, tag = 'input window, operand 0, single buffered']
    #allocation3 [shape = 's32[1]{0}', space=sflag, size = 0x4, scoped, tag = 'scoped memory for stat_layer.1']
    %7 = vsyncpa [#allocation3], 0
    // Predicated region
    $region2: #{stat_layer.1} parent=1 // pred_check
      _
    $region3: #{stat_layer.1} parent=1 // pred_check_branch
      %9 = sbr.rel (0) target = $region5
    $region4: #{stat_layer.1} parent=1 // pred_region
      %s11 = ssub.s32 16384, 16384
      %12 = vsyncadd [#allocation3], %s11
      %s13 = sshll.u32 [#allocation2], 4
      %s14 = int_to_ptr.vmem [resolvable:$true] %s13
      %19 = dma.hbm_to_vmem [thread:$0]  %s0, 16384, %s14, [#allocation3], 64, 64, 4
    $region5: #{stat_layer.1} parent=1 // pred_fallthru
      _
    // Predicated region
    $region6: #{stat_layer.1} parent=1 // pred_check
      _
    $region7: #{stat_layer.1} parent=1 // pred_check_branch
      %21 = sbr.rel (0) target = $region9
    $region8: #{stat_layer.1} parent=1 // pred_region
      _
    $region9: #{stat_layer.1} parent=1 // pred_fallthru
      _
    // Predicated region
    $region10: #{stat_layer.1} parent=1 // pred_check
      _
    $region11: #{stat_layer.1} parent=1 // pred_check_branch
      %23 = sbr.rel (0) target = $region13
    $region12: #{stat_layer.1} parent=1 // pred_region
      %24 = dma.done [#allocation3], 16384
    $region13: #{stat_layer.1} parent=1 // pred_fallthru
      _
    %v26 = vld [vmem:[%s1] sm:$0xff]
    %v27 = vld [vmem:[%s1 + $0x8] sm:$0xff]
    %v30 = vcombine.high %v26, %v26
    %v31 = vcombine.high %v27, %v27
    %vm34 = vcmask 1043456
    %v35 = vsel %vm34, %v26, 0.0
    %v36 = vsel %vm34, %v30, 0.0
    %v37 = vadd.f32 %v35, %v36
    %v38 = vsel %vm34, %v27, 0.0
    %v39 = vadd.f32 %v37, %v38
    %v40 = vsel %vm34, %v31, 0.0
    %v41 = vadd.f32 %v39, %v40
    %42 = vadd.xlane.f32.xlu0 %v41
    %v43 = vpop.xlane.xlu0 %42
    %v44 = vrcp.pop 512.0
    %v45 = vmul.f32 %v43, %v44
    %v48 = vunpack.c.l.s4 839922192
    %v49 = vunpack.c.0.s8 %v48
    %v50 = vlaneseq
    %v51 = vshrl.u32 %v50, 7
    %v52 = vsub.s32 %v49, %v51
    %v53 = vrot.slane %v45, %v52
    %v55 = vsub.f32 %v26, %v53
    %v56 = vsub.f32 %v27, %v53
    %v59 = vcombine.high %v55, %v55
    %v60 = vcombine.high %v56, %v56
    %v63 = vpack.c.bf16 %v55, %v55
    %v64 = vpack.c.bf16 %v59, %v59
    %v65 = vpack.c.bf16 %v56, %v56
    %v66 = vpack.c.bf16 %v60, %v60
    %v67 = vunpack.c.l.bf16 %v63
    %v68 = vunpack.c.l.bf16 %v64
    %v69 = vunpack.c.l.bf16 %v65
    %v70 = vunpack.c.l.bf16 %v66
    %v75 = vcombine.low %v67, %v68
    %v76 = vcombine.low %v69, %v70
    %v79 = vsub.f32 %v55, %v75
    %v80 = vsub.f32 %v56, %v76
    %v83 = vcombine.high %v79, %v79
    %v84 = vcombine.high %v80, %v80
    %v87 = vpack.c.bf16 %v79, %v79
    %v88 = vpack.c.bf16 %v83, %v83
    %v89 = vpack.c.bf16 %v80, %v80
    %v90 = vpack.c.bf16 %v84, %v84
    %v91 = vmul.f32 %v55, %v55
    %v92 = vmul.f32 %v56, %v56
    %v95 = vcombine.high %v91, %v91
    %v96 = vcombine.high %v92, %v92
    %v99 = vpack.c.bf16 %v91, %v91
    %v100 = vpack.c.bf16 %v95, %v95
    %v101 = vpack.c.bf16 %v92, %v92
    %v102 = vpack.c.bf16 %v96, %v96
    %v103 = vunpack.c.l.bf16 %v99
    %v104 = vunpack.c.l.bf16 %v100
    %v105 = vunpack.c.l.bf16 %v101
    %v106 = vunpack.c.l.bf16 %v102
    %v111 = vcombine.low %v103, %v104
    %v112 = vcombine.low %v105, %v106
    %v115 = vsub.f32 %v91, %v111
    %v116 = vsub.f32 %v92, %v112
    %v119 = vcombine.high %v115, %v115
    %v120 = vcombine.high %v116, %v116
    %v123 = vpack.c.bf16 %v115, %v115
    %v124 = vpack.c.bf16 %v119, %v119
    %v125 = vpack.c.bf16 %v116, %v116
    %v126 = vpack.c.bf16 %v120, %v120
    %v127 = vld [vmem:[#allocation2] sm:$0xf]
    %v128 = vld [vmem:[#allocation2 + $0x4] sm:$0xf]
    %v129 = vld [vmem:[#allocation2 + $0x8] sm:$0xf]
    %v130 = vld [vmem:[#allocation2 + $0xc] sm:$0xf]
    %v131 = vld [vmem:[#allocation2 + $0x10] sm:$0xf]
    %v132 = vld [vmem:[#allocation2 + $0x14] sm:$0xf]
    %v133 = vld [vmem:[#allocation2 + $0x18] sm:$0xf]
    %v134 = vld [vmem:[#allocation2 + $0x1c] sm:$0xf]
    %v135 = vld [vmem:[#allocation2 + $0x20] sm:$0xf]
    %v136 = vld [vmem:[#allocation2 + $0x24] sm:$0xf]
    %v137 = vld [vmem:[#allocation2 + $0x28] sm:$0xf]
    %v138 = vld [vmem:[#allocation2 + $0x2c] sm:$0xf]
    %v139 = vld [vmem:[#allocation2 + $0x30] sm:$0xf]
    %v140 = vld [vmem:[#allocation2 + $0x34] sm:$0xf]
    %v141 = vld [vmem:[#allocation2 + $0x38] sm:$0xf]
    %v142 = vld [vmem:[#allocation2 + $0x3c] sm:$0xf]
    %v143 = vld [vmem:[#allocation2 + $0x40] sm:$0xf]
    %v144 = vld [vmem:[#allocation2 + $0x44] sm:$0xf]
    %v145 = vld [vmem:[#allocation2 + $0x48] sm:$0xf]
    %v146 = vld [vmem:[#allocation2 + $0x4c] sm:$0xf]
    %v147 = vld [vmem:[#allocation2 + $0x50] sm:$0xf]
    %v148 = vld [vmem:[#allocation2 + $0x54] sm:$0xf]
    %v149 = vld [vmem:[#allocation2 + $0x58] sm:$0xf]
    %v150 = vld [vmem:[#allocation2 + $0x5c] sm:$0xf]
    %v151 = vld [vmem:[#allocation2 + $0x60] sm:$0xf]
    %v152 = vld [vmem:[#allocation2 + $0x64] sm:$0xf]
    %v153 = vld [vmem:[#allocation2 + $0x68] sm:$0xf]
    %v154 = vld [vmem:[#allocation2 + $0x6c] sm:$0xf]
    %v155 = vld [vmem:[#allocation2 + $0x70] sm:$0xf]
    %v156 = vld [vmem:[#allocation2 + $0x74] sm:$0xf]
    %v157 = vld [vmem:[#allocation2 + $0x78] sm:$0xf]
    %v158 = vld [vmem:[#allocation2 + $0x7c] sm:$0xf]
    %v159 = vld [vmem:[#allocation2 + $0x80] sm:$0xf]
    %v160 = vld [vmem:[#allocation2 + $0x84] sm:$0xf]
    %v161 = vld [vmem:[#allocation2 + $0x88] sm:$0xf]
    %v162 = vld [vmem:[#allocation2 + $0x8c] sm:$0xf]
    %v163 = vld [vmem:[#allocation2 + $0x90] sm:$0xf]
    %v164 = vld [vmem:[#allocation2 + $0x94] sm:$0xf]
    %v165 = vld [vmem:[#allocation2 + $0x98] sm:$0xf]
    %v166 = vld [vmem:[#allocation2 + $0x9c] sm:$0xf]
    %v167 = vld [vmem:[#allocation2 + $0xa0] sm:$0xf]
    %v168 = vld [vmem:[#allocation2 + $0xa4] sm:$0xf]
    %v169 = vld [vmem:[#allocation2 + $0xa8] sm:$0xf]
    %v170 = vld [vmem:[#allocation2 + $0xac] sm:$0xf]
    %v171 = vld [vmem:[#allocation2 + $0xb0] sm:$0xf]
    %v172 = vld [vmem:[#allocation2 + $0xb4] sm:$0xf]
    %v173 = vld [vmem:[#allocation2 + $0xb8] sm:$0xf]
    %v174 = vld [vmem:[#allocation2 + $0xbc] sm:$0xf]
    %v175 = vld [vmem:[#allocation2 + $0xc0] sm:$0xf]
    %v176 = vld [vmem:[#allocation2 + $0xc4] sm:$0xf]
    %v177 = vld [vmem:[#allocation2 + $0xc8] sm:$0xf]
    %v178 = vld [vmem:[#allocation2 + $0xcc] sm:$0xf]
    %v179 = vld [vmem:[#allocation2 + $0xd0] sm:$0xf]
    %v180 = vld [vmem:[#allocation2 + $0xd4] sm:$0xf]
    %v181 = vld [vmem:[#allocation2 + $0xd8] sm:$0xf]
    %v182 = vld [vmem:[#allocation2 + $0xdc] sm:$0xf]
    %v183 = vld [vmem:[#allocation2 + $0xe0] sm:$0xf]
    %v184 = vld [vmem:[#allocation2 + $0xe4] sm:$0xf]
    %v185 = vld [vmem:[#allocation2 + $0xe8] sm:$0xf]
    %v186 = vld [vmem:[#allocation2 + $0xec] sm:$0xf]
    %v187 = vld [vmem:[#allocation2 + $0xf0] sm:$0xf]
    %v188 = vld [vmem:[#allocation2 + $0xf4] sm:$0xf]
    %v189 = vld [vmem:[#allocation2 + $0xf8] sm:$0xf]
    %v190 = vld [vmem:[#allocation2 + $0xfc] sm:$0xf]
    %v191 = vld [vmem:[#allocation2 + $0x100] sm:$0xf]
    %v192 = vld [vmem:[#allocation2 + $0x104] sm:$0xf]
    %v193 = vld [vmem:[#allocation2 + $0x108] sm:$0xf]
    %v194 = vld [vmem:[#allocation2 + $0x10c] sm:$0xf]
    %v195 = vld [vmem:[#allocation2 + $0x110] sm:$0xf]
    %v196 = vld [vmem:[#allocation2 + $0x114] sm:$0xf]
    %v197 = vld [vmem:[#allocation2 + $0x118] sm:$0xf]
    %v198 = vld [vmem:[#allocation2 + $0x11c] sm:$0xf]
    %v199 = vld [vmem:[#allocation2 + $0x120] sm:$0xf]
    %v200 = vld [vmem:[#allocation2 + $0x124] sm:$0xf]
    %v201 = vld [vmem:[#allocation2 + $0x128] sm:$0xf]
    %v202 = vld [vmem:[#allocation2 + $0x12c] sm:$0xf]
    %v203 = vld [vmem:[#allocation2 + $0x130] sm:$0xf]
    %v204 = vld [vmem:[#allocation2 + $0x134] sm:$0xf]
    %v205 = vld [vmem:[#allocation2 + $0x138] sm:$0xf]
    %v206 = vld [vmem:[#allocation2 + $0x13c] sm:$0xf]
    %v207 = vld [vmem:[#allocation2 + $0x140] sm:$0xf]
    %v208 = vld [vmem:[#allocation2 + $0x144] sm:$0xf]
    %v209 = vld [vmem:[#allocation2 + $0x148] sm:$0xf]
    %v210 = vld [vmem:[#allocation2 + $0x14c] sm:$0xf]
    %v211 = vld [vmem:[#allocation2 + $0x150] sm:$0xf]
    %v212 = vld [vmem:[#allocation2 + $0x154] sm:$0xf]
    %v213 = vld [vmem:[#allocation2 + $0x158] sm:$0xf]
    %v214 = vld [vmem:[#allocation2 + $0x15c] sm:$0xf]
    %v215 = vld [vmem:[#allocation2 + $0x160] sm:$0xf]
    %v216 = vld [vmem:[#allocation2 + $0x164] sm:$0xf]
    %v217 = vld [vmem:[#allocation2 + $0x168] sm:$0xf]
    %v218 = vld [vmem:[#allocation2 + $0x16c] sm:$0xf]
    %v219 = vld [vmem:[#allocation2 + $0x170] sm:$0xf]
    %v220 = vld [vmem:[#allocation2 + $0x174] sm:$0xf]
    %v221 = vld [vmem:[#allocation2 + $0x178] sm:$0xf]
    %v222 = vld [vmem:[#allocation2 + $0x17c] sm:$0xf]
    %v223 = vld [vmem:[#allocation2 + $0x180] sm:$0xf]
    %v224 = vld [vmem:[#allocation2 + $0x184] sm:$0xf]
    %v225 = vld [vmem:[#allocation2 + $0x188] sm:$0xf]
    %v226 = vld [vmem:[#allocation2 + $0x18c] sm:$0xf]
    %v227 = vld [vmem:[#allocation2 + $0x190] sm:$0xf]
    %v228 = vld [vmem:[#allocation2 + $0x194] sm:$0xf]
    %v229 = vld [vmem:[#allocation2 + $0x198] sm:$0xf]
    %v230 = vld [vmem:[#allocation2 + $0x19c] sm:$0xf]
    %v231 = vld [vmem:[#allocation2 + $0x1a0] sm:$0xf]
    %v232 = vld [vmem:[#allocation2 + $0x1a4] sm:$0xf]
    %v233 = vld [vmem:[#allocation2 + $0x1a8] sm:$0xf]
    %v234 = vld [vmem:[#allocation2 + $0x1ac] sm:$0xf]
    %v235 = vld [vmem:[#allocation2 + $0x1b0] sm:$0xf]
    %v236 = vld [vmem:[#allocation2 + $0x1b4] sm:$0xf]
    %v237 = vld [vmem:[#allocation2 + $0x1b8] sm:$0xf]
    %v238 = vld [vmem:[#allocation2 + $0x1bc] sm:$0xf]
    %v239 = vld [vmem:[#allocation2 + $0x1c0] sm:$0xf]
    %v240 = vld [vmem:[#allocation2 + $0x1c4] sm:$0xf]
    %v241 = vld [vmem:[#allocation2 + $0x1c8] sm:$0xf]
    %v242 = vld [vmem:[#allocation2 + $0x1cc] sm:$0xf]
    %v243 = vld [vmem:[#allocation2 + $0x1d0] sm:$0xf]
    %v244 = vld [vmem:[#allocation2 + $0x1d4] sm:$0xf]
    %v245 = vld [vmem:[#allocation2 + $0x1d8] sm:$0xf]
    %v246 = vld [vmem:[#allocation2 + $0x1dc] sm:$0xf]
    %v247 = vld [vmem:[#allocation2 + $0x1e0] sm:$0xf]
    %v248 = vld [vmem:[#allocation2 + $0x1e4] sm:$0xf]
    %v249 = vld [vmem:[#allocation2 + $0x1e8] sm:$0xf]
    %v250 = vld [vmem:[#allocation2 + $0x1ec] sm:$0xf]
    %v251 = vld [vmem:[#allocation2 + $0x1f0] sm:$0xf]
    %v252 = vld [vmem:[#allocation2 + $0x1f4] sm:$0xf]
    %v253 = vld [vmem:[#allocation2 + $0x1f8] sm:$0xf]
    %v254 = vld [vmem:[#allocation2 + $0x1fc] sm:$0xf]
    %v255 = vld [vmem:[#allocation2 + $0x200] sm:$0xf]
    %v256 = vld [vmem:[#allocation2 + $0x204] sm:$0xf]
    %v257 = vld [vmem:[#allocation2 + $0x208] sm:$0xf]
    %v258 = vld [vmem:[#allocation2 + $0x20c] sm:$0xf]
    %v259 = vld [vmem:[#allocation2 + $0x210] sm:$0xf]
    %v260 = vld [vmem:[#allocation2 + $0x214] sm:$0xf]
    %v261 = vld [vmem:[#allocation2 + $0x218] sm:$0xf]
    %v262 = vld [vmem:[#allocation2 + $0x21c] sm:$0xf]
    %v263 = vld [vmem:[#allocation2 + $0x220] sm:$0xf]
    %v264 = vld [vmem:[#allocation2 + $0x224] sm:$0xf]
    %v265 = vld [vmem:[#allocation2 + $0x228] sm:$0xf]
    %v266 = vld [vmem:[#allocation2 + $0x22c] sm:$0xf]
    %v267 = vld [vmem:[#allocation2 + $0x230] sm:$0xf]
    %v268 = vld [vmem:[#allocation2 + $0x234] sm:$0xf]
    %v269 = vld [vmem:[#allocation2 + $0x238] sm:$0xf]
    %v270 = vld [vmem:[#allocation2 + $0x23c] sm:$0xf]
    %v271 = vld [vmem:[#allocation2 + $0x240] sm:$0xf]
    %v272 = vld [vmem:[#allocation2 + $0x244] sm:$0xf]
    %v273 = vld [vmem:[#allocation2 + $0x248] sm:$0xf]
    %v274 = vld [vmem:[#allocation2 + $0x24c] sm:$0xf]
    %v275 = vld [vmem:[#allocation2 + $0x250] sm:$0xf]
    %v276 = vld [vmem:[#allocation2 + $0x254] sm:$0xf]
    %v277 = vld [vmem:[#allocation2 + $0x258] sm:$0xf]
    %v278 = vld [vmem:[#allocation2 + $0x25c] sm:$0xf]
    %v279 = vld [vmem:[#allocation2 + $0x260] sm:$0xf]
    %v280 = vld [vmem:[#allocation2 + $0x264] sm:$0xf]
    %v281 = vld [vmem:[#allocation2 + $0x268] sm:$0xf]
    %v282 = vld [vmem:[#allocation2 + $0x26c] sm:$0xf]
    %v283 = vld [vmem:[#allocation2 + $0x270] sm:$0xf]
    %v284 = vld [vmem:[#allocation2 + $0x274] sm:$0xf]
    %v285 = vld [vmem:[#allocation2 + $0x278] sm:$0xf]
    %v286 = vld [vmem:[#allocation2 + $0x27c] sm:$0xf]
    %v287 = vld [vmem:[#allocation2 + $0x280] sm:$0xf]
    %v288 = vld [vmem:[#allocation2 + $0x284] sm:$0xf]
    %v289 = vld [vmem:[#allocation2 + $0x288] sm:$0xf]
    %v290 = vld [vmem:[#allocation2 + $0x28c] sm:$0xf]
    %v291 = vld [vmem:[#allocation2 + $0x290] sm:$0xf]
    %v292 = vld [vmem:[#allocation2 + $0x294] sm:$0xf]
    %v293 = vld [vmem:[#allocation2 + $0x298] sm:$0xf]
    %v294 = vld [vmem:[#allocation2 + $0x29c] sm:$0xf]
    %v295 = vld [vmem:[#allocation2 + $0x2a0] sm:$0xf]
    %v296 = vld [vmem:[#allocation2 + $0x2a4] sm:$0xf]
    %v297 = vld [vmem:[#allocation2 + $0x2a8] sm:$0xf]
    %v298 = vld [vmem:[#allocation2 + $0x2ac] sm:$0xf]
    %v299 = vld [vmem:[#allocation2 + $0x2b0] sm:$0xf]
    %v300 = vld [vmem:[#allocation2 + $0x2b4] sm:$0xf]
    %v301 = vld [vmem:[#allocation2 + $0x2b8] sm:$0xf]
    %v302 = vld [vmem:[#allocation2 + $0x2bc] sm:$0xf]
    %v303 = vld [vmem:[#allocation2 + $0x2c0] sm:$0xf]
    %v304 = vld [vmem:[#allocation2 + $0x2c4] sm:$0xf]
    %v305 = vld [vmem:[#allocation2 + $0x2c8] sm:$0xf]
    %v306 = vld [vmem:[#allocation2 + $0x2cc] sm:$0xf]
    %v307 = vld [vmem:[#allocation2 + $0x2d0] sm:$0xf]
    %v308 = vld [vmem:[#allocation2 + $0x2d4] sm:$0xf]
    %v309 = vld [vmem:[#allocation2 + $0x2d8] sm:$0xf]
    %v310 = vld [vmem:[#allocation2 + $0x2dc] sm:$0xf]
    %v311 = vld [vmem:[#allocation2 + $0x2e0] sm:$0xf]
    %v312 = vld [vmem:[#allocation2 + $0x2e4] sm:$0xf]
    %v313 = vld [vmem:[#allocation2 + $0x2e8] sm:$0xf]
    %v314 = vld [vmem:[#allocation2 + $0x2ec] sm:$0xf]
    %v315 = vld [vmem:[#allocation2 + $0x2f0] sm:$0xf]
    %v316 = vld [vmem:[#allocation2 + $0x2f4] sm:$0xf]
    %v317 = vld [vmem:[#allocation2 + $0x2f8] sm:$0xf]
    %v318 = vld [vmem:[#allocation2 + $0x2fc] sm:$0xf]
    %v319 = vld [vmem:[#allocation2 + $0x300] sm:$0xf]
    %v320 = vld [vmem:[#allocation2 + $0x304] sm:$0xf]
    %v321 = vld [vmem:[#allocation2 + $0x308] sm:$0xf]
    %v322 = vld [vmem:[#allocation2 + $0x30c] sm:$0xf]
    %v323 = vld [vmem:[#allocation2 + $0x310] sm:$0xf]
    %v324 = vld [vmem:[#allocation2 + $0x314] sm:$0xf]
    %v325 = vld [vmem:[#allocation2 + $0x318] sm:$0xf]
    %v326 = vld [vmem:[#allocation2 + $0x31c] sm:$0xf]
    %v327 = vld [vmem:[#allocation2 + $0x320] sm:$0xf]
    %v328 = vld [vmem:[#allocation2 + $0x324] sm:$0xf]
    %v329 = vld [vmem:[#allocation2 + $0x328] sm:$0xf]
    %v330 = vld [vmem:[#allocation2 + $0x32c] sm:$0xf]
    %v331 = vld [vmem:[#allocation2 + $0x330] sm:$0xf]
    %v332 = vld [vmem:[#allocation2 + $0x334] sm:$0xf]
    %v333 = vld [vmem:[#allocation2 + $0x338] sm:$0xf]
    %v334 = vld [vmem:[#allocation2 + $0x33c] sm:$0xf]
    %v335 = vld [vmem:[#allocation2 + $0x340] sm:$0xf]
    %v336 = vld [vmem:[#allocation2 + $0x344] sm:$0xf]
    %v337 = vld [vmem:[#allocation2 + $0x348] sm:$0xf]
    %v338 = vld [vmem:[#allocation2 + $0x34c] sm:$0xf]
    %v339 = vld [vmem:[#allocation2 + $0x350] sm:$0xf]
    %v340 = vld [vmem:[#allocation2 + $0x354] sm:$0xf]
    %v341 = vld [vmem:[#allocation2 + $0x358] sm:$0xf]
    %v342 = vld [vmem:[#allocation2 + $0x35c] sm:$0xf]
    %v343 = vld [vmem:[#allocation2 + $0x360] sm:$0xf]
    %v344 = vld [vmem:[#allocation2 + $0x364] sm:$0xf]
    %v345 = vld [vmem:[#allocation2 + $0x368] sm:$0xf]
    %v346 = vld [vmem:[#allocation2 + $0x36c] sm:$0xf]
    %v347 = vld [vmem:[#allocation2 + $0x370] sm:$0xf]
    %v348 = vld [vmem:[#allocation2 + $0x374] sm:$0xf]
    %v349 = vld [vmem:[#allocation2 + $0x378] sm:$0xf]
    %v350 = vld [vmem:[#allocation2 + $0x37c] sm:$0xf]
    %v351 = vld [vmem:[#allocation2 + $0x380] sm:$0xf]
    %v352 = vld [vmem:[#allocation2 + $0x384] sm:$0xf]
    %v353 = vld [vmem:[#allocation2 + $0x388] sm:$0xf]
    %v354 = vld [vmem:[#allocation2 + $0x38c] sm:$0xf]
    %v355 = vld [vmem:[#allocation2 + $0x390] sm:$0xf]
    %v356 = vld [vmem:[#allocation2 + $0x394] sm:$0xf]
    %v357 = vld [vmem:[#allocation2 + $0x398] sm:$0xf]
    %v358 = vld [vmem:[#allocation2 + $0x39c] sm:$0xf]
    %v359 = vld [vmem:[#allocation2 + $0x3a0] sm:$0xf]
    %v360 = vld [vmem:[#allocation2 + $0x3a4] sm:$0xf]
    %v361 = vld [vmem:[#allocation2 + $0x3a8] sm:$0xf]
    %v362 = vld [vmem:[#allocation2 + $0x3ac] sm:$0xf]
    %v363 = vld [vmem:[#allocation2 + $0x3b0] sm:$0xf]
    %v364 = vld [vmem:[#allocation2 + $0x3b4] sm:$0xf]
    %v365 = vld [vmem:[#allocation2 + $0x3b8] sm:$0xf]
    %v366 = vld [vmem:[#allocation2 + $0x3bc] sm:$0xf]
    %v367 = vld [vmem:[#allocation2 + $0x3c0] sm:$0xf]
    %v368 = vld [vmem:[#allocation2 + $0x3c4] sm:$0xf]
    %v369 = vld [vmem:[#allocation2 + $0x3c8] sm:$0xf]
    %v370 = vld [vmem:[#allocation2 + $0x3cc] sm:$0xf]
    %v371 = vld [vmem:[#allocation2 + $0x3d0] sm:$0xf]
    %v372 = vld [vmem:[#allocation2 + $0x3d4] sm:$0xf]
    %v373 = vld [vmem:[#allocation2 + $0x3d8] sm:$0xf]
    %v374 = vld [vmem:[#allocation2 + $0x3dc] sm:$0xf]
    %v375 = vld [vmem:[#allocation2 + $0x3e0] sm:$0xf]
    %v376 = vld [vmem:[#allocation2 + $0x3e4] sm:$0xf]
    %v377 = vld [vmem:[#allocation2 + $0x3e8] sm:$0xf]
    %v378 = vld [vmem:[#allocation2 + $0x3ec] sm:$0xf]
    %v379 = vld [vmem:[#allocation2 + $0x3f0] sm:$0xf]
    %v380 = vld [vmem:[#allocation2 + $0x3f4] sm:$0xf]
    %v381 = vld [vmem:[#allocation2 + $0x3f8] sm:$0xf]
    %v382 = vld [vmem:[#allocation2 + $0x3fc] sm:$0xf]
    %v639 = vunpack.c.l.b16 %v127
    %v640 = vunpack.c.l.b16 %v128
    %v641 = vunpack.c.l.b16 %v129
    %v642 = vunpack.c.l.b16 %v130
    %v643 = vunpack.c.l.b16 %v131
    %v644 = vunpack.c.l.b16 %v132
    %v645 = vunpack.c.l.b16 %v133
    %v646 = vunpack.c.l.b16 %v134
    %v647 = vunpack.c.l.b16 %v135
    %v648 = vunpack.c.l.b16 %v136
    %v649 = vunpack.c.l.b16 %v137
    %v650 = vunpack.c.l.b16 %v138
    %v651 = vunpack.c.l.b16 %v139
    %v652 = vunpack.c.l.b16 %v140
    %v653 = vunpack.c.l.b16 %v141
    %v654 = vunpack.c.l.b16 %v142
    %v655 = vunpack.c.l.b16 %v143
    %v656 = vunpack.c.l.b16 %v144
    %v657 = vunpack.c.l.b16 %v145
    %v658 = vunpack.c.l.b16 %v146
    %v659 = vunpack.c.l.b16 %v147
    %v660 = vunpack.c.l.b16 %v148
    %v661 = vunpack.c.l.b16 %v149
    %v662 = vunpack.c.l.b16 %v150
    %v663 = vunpack.c.l.b16 %v151
    %v664 = vunpack.c.l.b16 %v152
    %v665 = vunpack.c.l.b16 %v153
    %v666 = vunpack.c.l.b16 %v154
    %v667 = vunpack.c.l.b16 %v155
    %v668 = vunpack.c.l.b16 %v156
    %v669 = vunpack.c.l.b16 %v157
    %v670 = vunpack.c.l.b16 %v158
    %v671 = vunpack.c.l.b16 %v159
    %v672 = vunpack.c.l.b16 %v160
    %v673 = vunpack.c.l.b16 %v161
    %v674 = vunpack.c.l.b16 %v162
    %v675 = vunpack.c.l.b16 %v163
    %v676 = vunpack.c.l.b16 %v164
    %v677 = vunpack.c.l.b16 %v165
    %v678 = vunpack.c.l.b16 %v166
    %v679 = vunpack.c.l.b16 %v167
    %v680 = vunpack.c.l.b16 %v168
    %v681 = vunpack.c.l.b16 %v169
    %v682 = vunpack.c.l.b16 %v170
    %v683 = vunpack.c.l.b16 %v171
    %v684 = vunpack.c.l.b16 %v172
    %v685 = vunpack.c.l.b16 %v173
    %v686 = vunpack.c.l.b16 %v174
    %v687 = vunpack.c.l.b16 %v175
    %v688 = vunpack.c.l.b16 %v176
    %v689 = vunpack.c.l.b16 %v177
    %v690 = vunpack.c.l.b16 %v178
    %v691 = vunpack.c.l.b16 %v179
    %v692 = vunpack.c.l.b16 %v180
    %v693 = vunpack.c.l.b16 %v181
    %v694 = vunpack.c.l.b16 %v182
    %v695 = vunpack.c.l.b16 %v183
    %v696 = vunpack.c.l.b16 %v184
    %v697 = vunpack.c.l.b16 %v185
    %v698 = vunpack.c.l.b16 %v186
    %v699 = vunpack.c.l.b16 %v187
    %v700 = vunpack.c.l.b16 %v188
    %v701 = vunpack.c.l.b16 %v189
    %v702 = vunpack.c.l.b16 %v190
    %v703 = vunpack.c.l.b16 %v191
    %v704 = vunpack.c.l.b16 %v192
    %v705 = vunpack.c.l.b16 %v193
    %v706 = vunpack.c.l.b16 %v194
    %v707 = vunpack.c.l.b16 %v195
    %v708 = vunpack.c.l.b16 %v196
    %v709 = vunpack.c.l.b16 %v197
    %v710 = vunpack.c.l.b16 %v198
    %v711 = vunpack.c.l.b16 %v199
    %v712 = vunpack.c.l.b16 %v200
    %v713 = vunpack.c.l.b16 %v201
    %v714 = vunpack.c.l.b16 %v202
    %v715 = vunpack.c.l.b16 %v203
    %v716 = vunpack.c.l.b16 %v204
    %v717 = vunpack.c.l.b16 %v205
    %v718 = vunpack.c.l.b16 %v206
    %v719 = vunpack.c.l.b16 %v207
    %v720 = vunpack.c.l.b16 %v208
    %v721 = vunpack.c.l.b16 %v209
    %v722 = vunpack.c.l.b16 %v210
    %v723 = vunpack.c.l.b16 %v211
    %v724 = vunpack.c.l.b16 %v212
    %v725 = vunpack.c.l.b16 %v213
    %v726 = vunpack.c.l.b16 %v214
    %v727 = vunpack.c.l.b16 %v215
    %v728 = vunpack.c.l.b16 %v216
    %v729 = vunpack.c.l.b16 %v217
    %v730 = vunpack.c.l.b16 %v218
    %v731 = vunpack.c.l.b16 %v219
    %v732 = vunpack.c.l.b16 %v220
    %v733 = vunpack.c.l.b16 %v221
    %v734 = vunpack.c.l.b16 %v222
    %v735 = vunpack.c.l.b16 %v223
    %v736 = vunpack.c.l.b16 %v224
    %v737 = vunpack.c.l.b16 %v225
    %v738 = vunpack.c.l.b16 %v226
    %v739 = vunpack.c.l.b16 %v227
    %v740 = vunpack.c.l.b16 %v228
    %v741 = vunpack.c.l.b16 %v229
    %v742 = vunpack.c.l.b16 %v230
    %v743 = vunpack.c.l.b16 %v231
    %v744 = vunpack.c.l.b16 %v232
    %v745 = vunpack.c.l.b16 %v233
    %v746 = vunpack.c.l.b16 %v234
    %v747 = vunpack.c.l.b16 %v235
    %v748 = vunpack.c.l.b16 %v236
    %v749 = vunpack.c.l.b16 %v237
    %v750 = vunpack.c.l.b16 %v238
    %v751 = vunpack.c.l.b16 %v239
    %v752 = vunpack.c.l.b16 %v240
    %v753 = vunpack.c.l.b16 %v241
    %v754 = vunpack.c.l.b16 %v242
    %v755 = vunpack.c.l.b16 %v243
    %v756 = vunpack.c.l.b16 %v244
    %v757 = vunpack.c.l.b16 %v245
    %v758 = vunpack.c.l.b16 %v246
    %v759 = vunpack.c.l.b16 %v247
    %v760 = vunpack.c.l.b16 %v248
    %v761 = vunpack.c.l.b16 %v249
    %v762 = vunpack.c.l.b16 %v250
    %v763 = vunpack.c.l.b16 %v251
    %v764 = vunpack.c.l.b16 %v252
    %v765 = vunpack.c.l.b16 %v253
    %v766 = vunpack.c.l.b16 %v254
    %v767 = vunpack.c.l.b16 %v255
    %v768 = vunpack.c.l.b16 %v256
    %v769 = vunpack.c.l.b16 %v257
    %v770 = vunpack.c.l.b16 %v258
    %v771 = vunpack.c.l.b16 %v259
    %v772 = vunpack.c.l.b16 %v260
    %v773 = vunpack.c.l.b16 %v261
    %v774 = vunpack.c.l.b16 %v262
    %v775 = vunpack.c.l.b16 %v263
    %v776 = vunpack.c.l.b16 %v264
    %v777 = vunpack.c.l.b16 %v265
    %v778 = vunpack.c.l.b16 %v266
    %v779 = vunpack.c.l.b16 %v267
    %v780 = vunpack.c.l.b16 %v268
    %v781 = vunpack.c.l.b16 %v269
    %v782 = vunpack.c.l.b16 %v270
    %v783 = vunpack.c.l.b16 %v271
    %v784 = vunpack.c.l.b16 %v272
    %v785 = vunpack.c.l.b16 %v273
    %v786 = vunpack.c.l.b16 %v274
    %v787 = vunpack.c.l.b16 %v275
    %v788 = vunpack.c.l.b16 %v276
    %v789 = vunpack.c.l.b16 %v277
    %v790 = vunpack.c.l.b16 %v278
    %v791 = vunpack.c.l.b16 %v279
    %v792 = vunpack.c.l.b16 %v280
    %v793 = vunpack.c.l.b16 %v281
    %v794 = vunpack.c.l.b16 %v282
    %v795 = vunpack.c.l.b16 %v283
    %v796 = vunpack.c.l.b16 %v284
    %v797 = vunpack.c.l.b16 %v285
    %v798 = vunpack.c.l.b16 %v286
    %v799 = vunpack.c.l.b16 %v287
    %v800 = vunpack.c.l.b16 %v288
    %v801 = vunpack.c.l.b16 %v289
    %v802 = vunpack.c.l.b16 %v290
    %v803 = vunpack.c.l.b16 %v291
    %v804 = vunpack.c.l.b16 %v292
    %v805 = vunpack.c.l.b16 %v293
    %v806 = vunpack.c.l.b16 %v294
    %v807 = vunpack.c.l.b16 %v295
    %v808 = vunpack.c.l.b16 %v296
    %v809 = vunpack.c.l.b16 %v297
    %v810 = vunpack.c.l.b16 %v298
    %v811 = vunpack.c.l.b16 %v299
    %v812 = vunpack.c.l.b16 %v300
    %v813 = vunpack.c.l.b16 %v301
    %v814 = vunpack.c.l.b16 %v302
    %v815 = vunpack.c.l.b16 %v303
    %v816 = vunpack.c.l.b16 %v304
    %v817 = vunpack.c.l.b16 %v305
    %v818 = vunpack.c.l.b16 %v306
    %v819 = vunpack.c.l.b16 %v307
    %v820 = vunpack.c.l.b16 %v308
    %v821 = vunpack.c.l.b16 %v309
    %v822 = vunpack.c.l.b16 %v310
    %v823 = vunpack.c.l.b16 %v311
    %v824 = vunpack.c.l.b16 %v312
    %v825 = vunpack.c.l.b16 %v313
    %v826 = vunpack.c.l.b16 %v314
    %v827 = vunpack.c.l.b16 %v315
    %v828 = vunpack.c.l.b16 %v316
    %v829 = vunpack.c.l.b16 %v317
    %v830 = vunpack.c.l.b16 %v318
    %v831 = vunpack.c.l.b16 %v319
    %v832 = vunpack.c.l.b16 %v320
    %v833 = vunpack.c.l.b16 %v321
    %v834 = vunpack.c.l.b16 %v322
    %v835 = vunpack.c.l.b16 %v323
    %v836 = vunpack.c.l.b16 %v324
    %v837 = vunpack.c.l.b16 %v325
    %v838 = vunpack.c.l.b16 %v326
    %v839 = vunpack.c.l.b16 %v327
    %v840 = vunpack.c.l.b16 %v328
    %v841 = vunpack.c.l.b16 %v329
    %v842 = vunpack.c.l.b16 %v330
    %v843 = vunpack.c.l.b16 %v331
    %v844 = vunpack.c.l.b16 %v332
    %v845 = vunpack.c.l.b16 %v333
    %v846 = vunpack.c.l.b16 %v334
    %v847 = vunpack.c.l.b16 %v335
    %v848 = vunpack.c.l.b16 %v336
    %v849 = vunpack.c.l.b16 %v337
    %v850 = vunpack.c.l.b16 %v338
    %v851 = vunpack.c.l.b16 %v339
    %v852 = vunpack.c.l.b16 %v340
    %v853 = vunpack.c.l.b16 %v341
    %v854 = vunpack.c.l.b16 %v342
    %v855 = vunpack.c.l.b16 %v343
    %v856 = vunpack.c.l.b16 %v344
    %v857 = vunpack.c.l.b16 %v345
    %v858 = vunpack.c.l.b16 %v346
    %v859 = vunpack.c.l.b16 %v347
    %v860 = vunpack.c.l.b16 %v348
    %v861 = vunpack.c.l.b16 %v349
    %v862 = vunpack.c.l.b16 %v350
    %v863 = vunpack.c.l.b16 %v351
    %v864 = vunpack.c.l.b16 %v352
    %v865 = vunpack.c.l.b16 %v353
    %v866 = vunpack.c.l.b16 %v354
    %v867 = vunpack.c.l.b16 %v355
    %v868 = vunpack.c.l.b16 %v356
    %v869 = vunpack.c.l.b16 %v357
    %v870 = vunpack.c.l.b16 %v358
    %v871 = vunpack.c.l.b16 %v359
    %v872 = vunpack.c.l.b16 %v360
    %v873 = vunpack.c.l.b16 %v361
    %v874 = vunpack.c.l.b16 %v362
    %v875 = vunpack.c.l.b16 %v363
    %v876 = vunpack.c.l.b16 %v364
    %v877 = vunpack.c.l.b16 %v365
    %v878 = vunpack.c.l.b16 %v366
    %v879 = vunpack.c.l.b16 %v367
    %v880 = vunpack.c.l.b16 %v368
    %v881 = vunpack.c.l.b16 %v369
    %v882 = vunpack.c.l.b16 %v370
    %v883 = vunpack.c.l.b16 %v371
    %v884 = vunpack.c.l.b16 %v372
    %v885 = vunpack.c.l.b16 %v373
    %v886 = vunpack.c.l.b16 %v374
    %v887 = vunpack.c.l.b16 %v375
    %v888 = vunpack.c.l.b16 %v376
    %v889 = vunpack.c.l.b16 %v377
    %v890 = vunpack.c.l.b16 %v378
    %v891 = vunpack.c.l.b16 %v379
    %v892 = vunpack.c.l.b16 %v380
    %v893 = vunpack.c.l.b16 %v381
    %v894 = vunpack.c.l.b16 %v382
    %v895 = vpack.c.b16 %v640, %v639
    %v896 = vpack.c.b16 %v642, %v641
    %v897 = vpack.c.b16 %v644, %v643
    %v898 = vpack.c.b16 %v646, %v645
    %v899 = vpack.c.b16 %v648, %v647
    %v900 = vpack.c.b16 %v650, %v649
    %v901 = vpack.c.b16 %v652, %v651
    %v902 = vpack.c.b16 %v654, %v653
    %v903 = vpack.c.b16 %v656, %v655
    %v904 = vpack.c.b16 %v658, %v657
    %v905 = vpack.c.b16 %v660, %v659
    %v906 = vpack.c.b16 %v662, %v661
    %v907 = vpack.c.b16 %v664, %v663
    %v908 = vpack.c.b16 %v666, %v665
    %v909 = vpack.c.b16 %v668, %v667
    %v910 = vpack.c.b16 %v670, %v669
    %v911 = vpack.c.b16 %v672, %v671
    %v912 = vpack.c.b16 %v674, %v673
    %v913 = vpack.c.b16 %v676, %v675
    %v914 = vpack.c.b16 %v678, %v677
    %v915 = vpack.c.b16 %v680, %v679
    %v916 = vpack.c.b16 %v682, %v681
    %v917 = vpack.c.b16 %v684, %v683
    %v918 = vpack.c.b16 %v686, %v685
    %v919 = vpack.c.b16 %v688, %v687
    %v920 = vpack.c.b16 %v690, %v689
    %v921 = vpack.c.b16 %v692, %v691
    %v922 = vpack.c.b16 %v694, %v693
    %v923 = vpack.c.b16 %v696, %v695
    %v924 = vpack.c.b16 %v698, %v697
    %v925 = vpack.c.b16 %v700, %v699
    %v926 = vpack.c.b16 %v702, %v701
    %v927 = vpack.c.b16 %v704, %v703
    %v928 = vpack.c.b16 %v706, %v705
    %v929 = vpack.c.b16 %v708, %v707
    %v930 = vpack.c.b16 %v710, %v709
    %v931 = vpack.c.b16 %v712, %v711
    %v932 = vpack.c.b16 %v714, %v713
    %v933 = vpack.c.b16 %v716, %v715
    %v934 = vpack.c.b16 %v718, %v717
    %v935 = vpack.c.b16 %v720, %v719
    %v936 = vpack.c.b16 %v722, %v721
    %v937 = vpack.c.b16 %v724, %v723
    %v938 = vpack.c.b16 %v726, %v725
    %v939 = vpack.c.b16 %v728, %v727
    %v940 = vpack.c.b16 %v730, %v729
    %v941 = vpack.c.b16 %v732, %v731
    %v942 = vpack.c.b16 %v734, %v733
    %v943 = vpack.c.b16 %v736, %v735
    %v944 = vpack.c.b16 %v738, %v737
    %v945 = vpack.c.b16 %v740, %v739
    %v946 = vpack.c.b16 %v742, %v741
    %v947 = vpack.c.b16 %v744, %v743
    %v948 = vpack.c.b16 %v746, %v745
    %v949 = vpack.c.b16 %v748, %v747
    %v950 = vpack.c.b16 %v750, %v749
    %v951 = vpack.c.b16 %v752, %v751
    %v952 = vpack.c.b16 %v754, %v753
    %v953 = vpack.c.b16 %v756, %v755
    %v954 = vpack.c.b16 %v758, %v757
    %v955 = vpack.c.b16 %v760, %v759
    %v956 = vpack.c.b16 %v762, %v761
    %v957 = vpack.c.b16 %v764, %v763
    %v958 = vpack.c.b16 %v766, %v765
    %v959 = vpack.c.b16 %v768, %v767
    %v960 = vpack.c.b16 %v770, %v769
    %v961 = vpack.c.b16 %v772, %v771
    %v962 = vpack.c.b16 %v774, %v773
    %v963 = vpack.c.b16 %v776, %v775
    %v964 = vpack.c.b16 %v778, %v777
    %v965 = vpack.c.b16 %v780, %v779
    %v966 = vpack.c.b16 %v782, %v781
    %v967 = vpack.c.b16 %v784, %v783
    %v968 = vpack.c.b16 %v786, %v785
    %v969 = vpack.c.b16 %v788, %v787
    %v970 = vpack.c.b16 %v790, %v789
    %v971 = vpack.c.b16 %v792, %v791
    %v972 = vpack.c.b16 %v794, %v793
    %v973 = vpack.c.b16 %v796, %v795
    %v974 = vpack.c.b16 %v798, %v797
    %v975 = vpack.c.b16 %v800, %v799
    %v976 = vpack.c.b16 %v802, %v801
    %v977 = vpack.c.b16 %v804, %v803
    %v978 = vpack.c.b16 %v806, %v805
    %v979 = vpack.c.b16 %v808, %v807
    %v980 = vpack.c.b16 %v810, %v809
    %v981 = vpack.c.b16 %v812, %v811
    %v982 = vpack.c.b16 %v814, %v813
    %v983 = vpack.c.b16 %v816, %v815
    %v984 = vpack.c.b16 %v818, %v817
    %v985 = vpack.c.b16 %v820, %v819
    %v986 = vpack.c.b16 %v822, %v821
    %v987 = vpack.c.b16 %v824, %v823
    %v988 = vpack.c.b16 %v826, %v825
    %v989 = vpack.c.b16 %v828, %v827
    %v990 = vpack.c.b16 %v830, %v829
    %v991 = vpack.c.b16 %v832, %v831
    %v992 = vpack.c.b16 %v834, %v833
    %v993 = vpack.c.b16 %v836, %v835
    %v994 = vpack.c.b16 %v838, %v837
    %v995 = vpack.c.b16 %v840, %v839
    %v996 = vpack.c.b16 %v842, %v841
    %v997 = vpack.c.b16 %v844, %v843
    %v998 = vpack.c.b16 %v846, %v845
    %v999 = vpack.c.b16 %v848, %v847
    %v1000 = vpack.c.b16 %v850, %v849
    %v1001 = vpack.c.b16 %v852, %v851
    %v1002 = vpack.c.b16 %v854, %v853
    %v1003 = vpack.c.b16 %v856, %v855
    %v1004 = vpack.c.b16 %v858, %v857
    %v1005 = vpack.c.b16 %v860, %v859
    %v1006 = vpack.c.b16 %v862, %v861
    %v1007 = vpack.c.b16 %v864, %v863
    %v1008 = vpack.c.b16 %v866, %v865
    %v1009 = vpack.c.b16 %v868, %v867
    %v1010 = vpack.c.b16 %v870, %v869
    %v1011 = vpack.c.b16 %v872, %v871
    %v1012 = vpack.c.b16 %v874, %v873
    %v1013 = vpack.c.b16 %v876, %v875
    %v1014 = vpack.c.b16 %v878, %v877
    %v1015 = vpack.c.b16 %v880, %v879
    %v1016 = vpack.c.b16 %v882, %v881
    %v1017 = vpack.c.b16 %v884, %v883
    %v1018 = vpack.c.b16 %v886, %v885
    %v1019 = vpack.c.b16 %v888, %v887
    %v1020 = vpack.c.b16 %v890, %v889
    %v1021 = vpack.c.b16 %v892, %v891
    %v1022 = vpack.c.b16 %v894, %v893
    %1151 = vmatprep.subr.bf16.mxu0 0
    %1152 = vmatpush1.bf16.msra.mxu0 %v902
    %1153 = vmatprep.subr.bf16.mxu0 0
    %1154 = vmatpush1.bf16.msra.mxu0 %v901
    %1155 = vmatprep.subr.bf16.mxu0 0
    %1156 = vmatpush1.bf16.msra.mxu0 %v900
    %1157 = vmatprep.subr.bf16.mxu0 0
    %1158 = vmatpush1.bf16.msra.mxu0 %v899
    %1159 = vmatprep.subr.bf16.mxu0 0
    %1160 = vmatpush1.bf16.msra.mxu0 %v898
    %1161 = vmatprep.subr.bf16.mxu0 0
    %1162 = vmatpush1.bf16.msra.mxu0 %v897
    %1163 = vmatprep.subr.bf16.mxu0 0
    %1164 = vmatpush1.bf16.msra.mxu0 %v896
    %1165 = vmatprep.subr.bf16.mxu0 0
    %1166 = vmatpush1.bf16.msra.mxu0 %v895
    %1167 = vmatprep.subr.bf16.mxu0 0
    %1168 = vmatpush2.bf16.msra.mxu0 %v910
    %1169 = vmatprep.subr.bf16.mxu0 0
    %1170 = vmatpush2.bf16.msra.mxu0 %v909
    %1171 = vmatprep.subr.bf16.mxu0 0
    %1172 = vmatpush2.bf16.msra.mxu0 %v908
    %1173 = vmatprep.subr.bf16.mxu0 0
    %1174 = vmatpush2.bf16.msra.mxu0 %v907
    %1175 = vmatprep.subr.bf16.mxu0 0
    %1176 = vmatpush2.bf16.msra.mxu0 %v906
    %1177 = vmatprep.subr.bf16.mxu0 0
    %1178 = vmatpush2.bf16.msra.mxu0 %v905
    %1179 = vmatprep.subr.bf16.mxu0 0
    %1180 = vmatpush2.bf16.msra.mxu0 %v904
    %1181 = vmatprep.subr.bf16.mxu0 0
    %1182 = vmatpush2.bf16.msra.mxu0 %v903
    %1183 = vmatprep.mubr.bf16.mxu0 %v64
    %1184 = vmatmul.mubr.bf16.gmra.mxu0 %v63
    %v1185 = vpop.f32.mrf.mxu0
    %v1186 = vadd.f32 0.0, %v1185
    %v1187 = vpop.f32.mrf.mxu0
    %v1188 = vpop.f32.mrf.mxu0
    %v1189 = vpop.f32.mrf.mxu0
    %1190 = vdwg.mxu0
    %1191 = vmatprep.subr.bf16.mxu0 0
    %1192 = vmatpush1.bf16.msra.mxu0 %v918
    %1193 = vmatprep.subr.bf16.mxu0 0
    %1194 = vmatpush1.bf16.msra.mxu0 %v917
    %1195 = vmatprep.subr.bf16.mxu0 0
    %1196 = vmatpush1.bf16.msra.mxu0 %v916
    %1197 = vmatprep.subr.bf16.mxu0 0
    %1198 = vmatpush1.bf16.msra.mxu0 %v915
    %1199 = vmatprep.subr.bf16.mxu0 0
    %1200 = vmatpush1.bf16.msra.mxu0 %v914
    %1201 = vmatprep.subr.bf16.mxu0 0
    %1202 = vmatpush1.bf16.msra.mxu0 %v913
    %1203 = vmatprep.subr.bf16.mxu0 0
    %1204 = vmatpush1.bf16.msra.mxu0 %v912
    %1205 = vmatprep.subr.bf16.mxu0 0
    %1206 = vmatpush1.bf16.msra.mxu0 %v911
    %1207 = vmatprep.subr.bf16.mxu0 0
    %1208 = vmatpush2.bf16.msra.mxu0 %v926
    %1209 = vmatprep.subr.bf16.mxu0 0
    %1210 = vmatpush2.bf16.msra.mxu0 %v925
    %1211 = vmatprep.subr.bf16.mxu0 0
    %1212 = vmatpush2.bf16.msra.mxu0 %v924
    %1213 = vmatprep.subr.bf16.mxu0 0
    %1214 = vmatpush2.bf16.msra.mxu0 %v923
    %1215 = vmatprep.subr.bf16.mxu0 0
    %1216 = vmatpush2.bf16.msra.mxu0 %v922
    %1217 = vmatprep.subr.bf16.mxu0 0
    %1218 = vmatpush2.bf16.msra.mxu0 %v921
    %1219 = vmatprep.subr.bf16.mxu0 0
    %1220 = vmatpush2.bf16.msra.mxu0 %v920
    %1221 = vmatprep.subr.bf16.mxu0 0
    %1222 = vmatpush2.bf16.msra.mxu0 %v919
    %1223 = vmatprep.mubr.bf16.mxu0 %v66
    %1224 = vmatmul.mubr.bf16.gmra.mxu0 %v65
    %v1225 = vpop.f32.mrf.mxu0
    %v1226 = vadd.f32 %v1186, %v1225
    %v1227 = vpop.f32.mrf.mxu0
    %v1228 = vpop.f32.mrf.mxu0
    %v1229 = vpop.f32.mrf.mxu0
    %1230 = vdwg.mxu0
    %1231 = vmatprep.subr.bf16.mxu0 0
    %1232 = vmatpush1.bf16.msra.mxu0 %v934
    %1233 = vmatprep.subr.bf16.mxu0 0
    %1234 = vmatpush1.bf16.msra.mxu0 %v933
    %1235 = vmatprep.subr.bf16.mxu0 0
    %1236 = vmatpush1.bf16.msra.mxu0 %v932
    %1237 = vmatprep.subr.bf16.mxu0 0
    %1238 = vmatpush1.bf16.msra.mxu0 %v931
    %1239 = vmatprep.subr.bf16.mxu0 0
    %1240 = vmatpush1.bf16.msra.mxu0 %v930
    %1241 = vmatprep.subr.bf16.mxu0 0
    %1242 = vmatpush1.bf16.msra.mxu0 %v929
    %1243 = vmatprep.subr.bf16.mxu0 0
    %1244 = vmatpush1.bf16.msra.mxu0 %v928
    %1245 = vmatprep.subr.bf16.mxu0 0
    %1246 = vmatpush1.bf16.msra.mxu0 %v927
    %1247 = vmatprep.subr.bf16.mxu0 0
    %1248 = vmatpush2.bf16.msra.mxu0 %v942
    %1249 = vmatprep.subr.bf16.mxu0 0
    %1250 = vmatpush2.bf16.msra.mxu0 %v941
    %1251 = vmatprep.subr.bf16.mxu0 0
    %1252 = vmatpush2.bf16.msra.mxu0 %v940
    %1253 = vmatprep.subr.bf16.mxu0 0
    %1254 = vmatpush2.bf16.msra.mxu0 %v939
    %1255 = vmatprep.subr.bf16.mxu0 0
    %1256 = vmatpush2.bf16.msra.mxu0 %v938
    %1257 = vmatprep.subr.bf16.mxu0 0
    %1258 = vmatpush2.bf16.msra.mxu0 %v937
    %1259 = vmatprep.subr.bf16.mxu0 0
    %1260 = vmatpush2.bf16.msra.mxu0 %v936
    %1261 = vmatprep.subr.bf16.mxu0 0
    %1262 = vmatpush2.bf16.msra.mxu0 %v935
    %1263 = vmatprep.mubr.bf16.mxu0 %v88
    %1264 = vmatmul.mubr.bf16.gmra.mxu0 %v87
    %v1265 = vpop.f32.mrf.mxu0
    %v1266 = vadd.f32 %v1226, %v1265
    %v1267 = vpop.f32.mrf.mxu0
    %v1268 = vpop.f32.mrf.mxu0
    %v1269 = vpop.f32.mrf.mxu0
    %1270 = vdwg.mxu0
    %1271 = vmatprep.subr.bf16.mxu0 0
    %1272 = vmatpush1.bf16.msra.mxu0 %v950
    %1273 = vmatprep.subr.bf16.mxu0 0
    %1274 = vmatpush1.bf16.msra.mxu0 %v949
    %1275 = vmatprep.subr.bf16.mxu0 0
    %1276 = vmatpush1.bf16.msra.mxu0 %v948
    %1277 = vmatprep.subr.bf16.mxu0 0
    %1278 = vmatpush1.bf16.msra.mxu0 %v947
    %1279 = vmatprep.subr.bf16.mxu0 0
    %1280 = vmatpush1.bf16.msra.mxu0 %v946
    %1281 = vmatprep.subr.bf16.mxu0 0
    %1282 = vmatpush1.bf16.msra.mxu0 %v945
    %1283 = vmatprep.subr.bf16.mxu0 0
    %1284 = vmatpush1.bf16.msra.mxu0 %v944
    %1285 = vmatprep.subr.bf16.mxu0 0
    %1286 = vmatpush1.bf16.msra.mxu0 %v943
    %1287 = vmatprep.subr.bf16.mxu0 0
    %1288 = vmatpush2.bf16.msra.mxu0 %v958
    %1289 = vmatprep.subr.bf16.mxu0 0
    %1290 = vmatpush2.bf16.msra.mxu0 %v957
    %1291 = vmatprep.subr.bf16.mxu0 0
    %1292 = vmatpush2.bf16.msra.mxu0 %v956
    %1293 = vmatprep.subr.bf16.mxu0 0
    %1294 = vmatpush2.bf16.msra.mxu0 %v955
    %1295 = vmatprep.subr.bf16.mxu0 0
    %1296 = vmatpush2.bf16.msra.mxu0 %v954
    %1297 = vmatprep.subr.bf16.mxu0 0
    %1298 = vmatpush2.bf16.msra.mxu0 %v953
    %1299 = vmatprep.subr.bf16.mxu0 0
    %1300 = vmatpush2.bf16.msra.mxu0 %v952
    %1301 = vmatprep.subr.bf16.mxu0 0
    %1302 = vmatpush2.bf16.msra.mxu0 %v951
    %1303 = vmatprep.mubr.bf16.mxu0 %v90
    %1304 = vmatmul.mubr.bf16.gmra.mxu0 %v89
    %v1305 = vpop.f32.mrf.mxu0
    %v1306 = vadd.f32 %v1266, %v1305
    %v1307 = vpop.f32.mrf.mxu0
    %v1308 = vpop.f32.mrf.mxu0
    %v1309 = vpop.f32.mrf.mxu0
    %1310 = vdwg.mxu0
    %1311 = vmatprep.subr.bf16.mxu0 0
    %1312 = vmatpush1.bf16.msra.mxu0 %v966
    %1313 = vmatprep.subr.bf16.mxu0 0
    %1314 = vmatpush1.bf16.msra.mxu0 %v965
    %1315 = vmatprep.subr.bf16.mxu0 0
    %1316 = vmatpush1.bf16.msra.mxu0 %v964
    %1317 = vmatprep.subr.bf16.mxu0 0
    %1318 = vmatpush1.bf16.msra.mxu0 %v963
    %1319 = vmatprep.subr.bf16.mxu0 0
    %1320 = vmatpush1.bf16.msra.mxu0 %v962
    %1321 = vmatprep.subr.bf16.mxu0 0
    %1322 = vmatpush1.bf16.msra.mxu0 %v961
    %1323 = vmatprep.subr.bf16.mxu0 0
    %1324 = vmatpush1.bf16.msra.mxu0 %v960
    %1325 = vmatprep.subr.bf16.mxu0 0
    %1326 = vmatpush1.bf16.msra.mxu0 %v959
    %1327 = vmatprep.subr.bf16.mxu0 0
    %1328 = vmatpush2.bf16.msra.mxu0 %v974
    %1329 = vmatprep.subr.bf16.mxu0 0
    %1330 = vmatpush2.bf16.msra.mxu0 %v973
    %1331 = vmatprep.subr.bf16.mxu0 0
    %1332 = vmatpush2.bf16.msra.mxu0 %v972
    %1333 = vmatprep.subr.bf16.mxu0 0
    %1334 = vmatpush2.bf16.msra.mxu0 %v971
    %1335 = vmatprep.subr.bf16.mxu0 0
    %1336 = vmatpush2.bf16.msra.mxu0 %v970
    %1337 = vmatprep.subr.bf16.mxu0 0
    %1338 = vmatpush2.bf16.msra.mxu0 %v969
    %1339 = vmatprep.subr.bf16.mxu0 0
    %1340 = vmatpush2.bf16.msra.mxu0 %v968
    %1341 = vmatprep.subr.bf16.mxu0 0
    %1342 = vmatpush2.bf16.msra.mxu0 %v967
    %1343 = vmatprep.mubr.bf16.mxu0 %v100
    %1344 = vmatmul.mubr.bf16.gmra.mxu0 %v99
    %v1345 = vpop.f32.mrf.mxu0
    %v1346 = vadd.f32 %v1306, %v1345
    %v1347 = vpop.f32.mrf.mxu0
    %v1348 = vpop.f32.mrf.mxu0
    %v1349 = vpop.f32.mrf.mxu0
    %1350 = vdwg.mxu0
    %1351 = vmatprep.subr.bf16.mxu0 0
    %1352 = vmatpush1.bf16.msra.mxu0 %v982
    %1353 = vmatprep.subr.bf16.mxu0 0
    %1354 = vmatpush1.bf16.msra.mxu0 %v981
    %1355 = vmatprep.subr.bf16.mxu0 0
    %1356 = vmatpush1.bf16.msra.mxu0 %v980
    %1357 = vmatprep.subr.bf16.mxu0 0
    %1358 = vmatpush1.bf16.msra.mxu0 %v979
    %1359 = vmatprep.subr.bf16.mxu0 0
    %1360 = vmatpush1.bf16.msra.mxu0 %v978
    %1361 = vmatprep.subr.bf16.mxu0 0
    %1362 = vmatpush1.bf16.msra.mxu0 %v977
    %1363 = vmatprep.subr.bf16.mxu0 0
    %1364 = vmatpush1.bf16.msra.mxu0 %v976
    %1365 = vmatprep.subr.bf16.mxu0 0
    %1366 = vmatpush1.bf16.msra.mxu0 %v975
    %1367 = vmatprep.subr.bf16.mxu0 0
    %1368 = vmatpush2.bf16.msra.mxu0 %v990
    %1369 = vmatprep.subr.bf16.mxu0 0
    %1370 = vmatpush2.bf16.msra.mxu0 %v989
    %1371 = vmatprep.subr.bf16.mxu0 0
    %1372 = vmatpush2.bf16.msra.mxu0 %v988
    %1373 = vmatprep.subr.bf16.mxu0 0
    %1374 = vmatpush2.bf16.msra.mxu0 %v987
    %1375 = vmatprep.subr.bf16.mxu0 0
    %1376 = vmatpush2.bf16.msra.mxu0 %v986
    %1377 = vmatprep.subr.bf16.mxu0 0
    %1378 = vmatpush2.bf16.msra.mxu0 %v985
    %1379 = vmatprep.subr.bf16.mxu0 0
    %1380 = vmatpush2.bf16.msra.mxu0 %v984
    %1381 = vmatprep.subr.bf16.mxu0 0
    %1382 = vmatpush2.bf16.msra.mxu0 %v983
    %1383 = vmatprep.mubr.bf16.mxu0 %v102
    %1384 = vmatmul.mubr.bf16.gmra.mxu0 %v101
    %v1385 = vpop.f32.mrf.mxu0
    %v1386 = vadd.f32 %v1346, %v1385
    %v1387 = vpop.f32.mrf.mxu0
    %v1388 = vpop.f32.mrf.mxu0
    %v1389 = vpop.f32.mrf.mxu0
    %1390 = vdwg.mxu0
    %1391 = vmatprep.subr.bf16.mxu0 0
    %1392 = vmatpush1.bf16.msra.mxu0 %v998
    %1393 = vmatprep.subr.bf16.mxu0 0
    %1394 = vmatpush1.bf16.msra.mxu0 %v997
    %1395 = vmatprep.subr.bf16.mxu0 0
    %1396 = vmatpush1.bf16.msra.mxu0 %v996
    %1397 = vmatprep.subr.bf16.mxu0 0
    %1398 = vmatpush1.bf16.msra.mxu0 %v995
    %1399 = vmatprep.subr.bf16.mxu0 0
    %1400 = vmatpush1.bf16.msra.mxu0 %v994
    %1401 = vmatprep.subr.bf16.mxu0 0
    %1402 = vmatpush1.bf16.msra.mxu0 %v993
    %1403 = vmatprep.subr.bf16.mxu0 0
    %1404 = vmatpush1.bf16.msra.mxu0 %v992
    %1405 = vmatprep.subr.bf16.mxu0 0
    %1406 = vmatpush1.bf16.msra.mxu0 %v991
    %1407 = vmatprep.subr.bf16.mxu0 0
    %1408 = vmatpush2.bf16.msra.mxu0 %v1006
    %1409 = vmatprep.subr.bf16.mxu0 0
    %1410 = vmatpush2.bf16.msra.mxu0 %v1005
    %1411 = vmatprep.subr.bf16.mxu0 0
    %1412 = vmatpush2.bf16.msra.mxu0 %v1004
    %1413 = vmatprep.subr.bf16.mxu0 0
    %1414 = vmatpush2.bf16.msra.mxu0 %v1003
    %1415 = vmatprep.subr.bf16.mxu0 0
    %1416 = vmatpush2.bf16.msra.mxu0 %v1002
    %1417 = vmatprep.subr.bf16.mxu0 0
    %1418 = vmatpush2.bf16.msra.mxu0 %v1001
    %1419 = vmatprep.subr.bf16.mxu0 0
    %1420 = vmatpush2.bf16.msra.mxu0 %v1000
    %1421 = vmatprep.subr.bf16.mxu0 0
    %1422 = vmatpush2.bf16.msra.mxu0 %v999
    %1423 = vmatprep.mubr.bf16.mxu0 %v124
    %1424 = vmatmul.mubr.bf16.gmra.mxu0 %v123
    %v1425 = vpop.f32.mrf.mxu0
    %v1426 = vadd.f32 %v1386, %v1425
    %v1427 = vpop.f32.mrf.mxu0
    %v1428 = vpop.f32.mrf.mxu0
    %v1429 = vpop.f32.mrf.mxu0
    %1430 = vdwg.mxu0
    %1431 = vmatprep.subr.bf16.mxu0 0
    %1432 = vmatpush1.bf16.msra.mxu0 %v1014
    %1433 = vmatprep.subr.bf16.mxu0 0
    %1434 = vmatpush1.bf16.msra.mxu0 %v1013
    %1435 = vmatprep.subr.bf16.mxu0 0
    %1436 = vmatpush1.bf16.msra.mxu0 %v1012
    %1437 = vmatprep.subr.bf16.mxu0 0
    %1438 = vmatpush1.bf16.msra.mxu0 %v1011
    %1439 = vmatprep.subr.bf16.mxu0 0
    %1440 = vmatpush1.bf16.msra.mxu0 %v1010
    %1441 = vmatprep.subr.bf16.mxu0 0
    %1442 = vmatpush1.bf16.msra.mxu0 %v1009
    %1443 = vmatprep.subr.bf16.mxu0 0
    %1444 = vmatpush1.bf16.msra.mxu0 %v1008
    %1445 = vmatprep.subr.bf16.mxu0 0
    %1446 = vmatpush1.bf16.msra.mxu0 %v1007
    %1447 = vmatprep.subr.bf16.mxu0 0
    %1448 = vmatpush2.bf16.msra.mxu0 %v1022
    %1449 = vmatprep.subr.bf16.mxu0 0
    %1450 = vmatpush2.bf16.msra.mxu0 %v1021
    %1451 = vmatprep.subr.bf16.mxu0 0
    %1452 = vmatpush2.bf16.msra.mxu0 %v1020
    %1453 = vmatprep.subr.bf16.mxu0 0
    %1454 = vmatpush2.bf16.msra.mxu0 %v1019
    %1455 = vmatprep.subr.bf16.mxu0 0
    %1456 = vmatpush2.bf16.msra.mxu0 %v1018
    %1457 = vmatprep.subr.bf16.mxu0 0
    %1458 = vmatpush2.bf16.msra.mxu0 %v1017
    %1459 = vmatprep.subr.bf16.mxu0 0
    %1460 = vmatpush2.bf16.msra.mxu0 %v1016
    %1461 = vmatprep.subr.bf16.mxu0 0
    %1462 = vmatpush2.bf16.msra.mxu0 %v1015
    %1463 = vmatprep.mubr.bf16.mxu0 %v126
    %1464 = vmatmul.mubr.bf16.gmra.mxu0 %v125
    %v1465 = vpop.f32.mrf.mxu0
    %v1466 = vadd.f32 %v1426, %v1465
    %v1467 = vpop.f32.mrf.mxu0
    %v1468 = vpop.f32.mrf.mxu0
    %v1469 = vpop.f32.mrf.mxu0
    %1470 = vdwg.mxu0
    %v1471 = vmul.f32 %v1466, %v1466
    %v1472 = vmul.f32 %v1471, 0.0625
    %1474 = vrot.lane.b32.xlu0 %v1472, 32
    %v1475 = vpop.permute.xlu0 %1474
    %v1477 = vsub.f32 %v1466, %v1475
    %v1478 = vmul.f32 %v1477, 0.06666667
    %v1479 = vmax.f32 %v1478, 0.0
    %v1480 = vmax.f32 %v1479, 1e-06
    %v1481 = vmin.f32 %v1480, 1000000.0
    %v1482 = vlog2.pop %v1481
    %v1483 = vmul.f32 %v1482, 0.6931472
    %1485 = vrot.lane.b32.xlu0 %v1483, 96
    %v1486 = vpop.permute.xlu0 %1485
    %vm1488 = vcmask 257024
    %1489 = vst.msk [vmem:[%s2] sm:$0xf] %vm1488, %v1486
    // Predicated region
    $region14: #{stat_layer.1} parent=1 // pred_check
      _
    $region15: #{stat_layer.1} parent=1 // pred_check_branch
      %1491 = sbr.rel (0) target = $region17
    $region16: #{stat_layer.1} parent=1 // pred_region
      _
    $region17: #{stat_layer.1} parent=1 // pred_fallthru
      _
    // Predicated region
    $region18: #{stat_layer.1} parent=1 // pred_check
      _
    $region19: #{stat_layer.1} parent=1 // pred_check_branch
      %1493 = sbr.rel (0) target = $region21
    $region20: #{stat_layer.1} parent=1 // pred_region
      _
    $region21: #{stat_layer.1} parent=1 // pred_fallthru
      _
    %1494 = vsyncpa [#allocation3], 1

</llo_original>
